<compile_context>
chip_gen: v6e
topology: v6e:2x2x1
jax: 0.10.0
libtpu: 0.0.40
codegen_flags: <defaults>
</compile_context>

<pallas_src>
import functools

import jax
import jax.numpy as jnp
from jax.experimental import pallas as pl
from jax.experimental.pallas import tpu as pltpu


def _round_up(a, m):
    return ((a + m - 1) // m) * m


def _choose_tiles(B, D_in, D_z, K_pad, in_bytes, vmem_budget_bytes):
    """Pick (tile_b, tile_k): batch tile and D_in-reduction tile under the VMEM budget."""
    d_in_pad = _round_up(D_in, 128)
    tile_k = min(d_in_pad, 1024)

    def usage(tb, tk):
        return (2 * tb * tk * in_bytes            # x tile (double-buffered)
                + 2 * tk * D_z * in_bytes         # w tile (double-buffered)
                + 2 * K_pad * D_z * in_bytes      # mu (worst-case 2 buffers)
                + 2 * D_z * 4                     # bias
                + 2 * tb * D_z * 4                # z output tile
                + 2 * tb * K_pad * 4              # q output tile
                + tb * D_z * 4                    # f32 accumulator scratch
                + 2 * tb * max(D_z, K_pad) * 4)   # temporaries headroom

    while tile_k > 128 and usage(8, tile_k) > vmem_budget_bytes:
        tile_k //= 2

    cap_b = min(_round_up(B, 8), 1024)
    tb, best_tb = 8, 8
    while tb <= cap_b:
        if usage(tb, tile_k) <= vmem_budget_bytes:
            best_tb = tb
        tb *= 2
    return best_tb, tile_k


def unidec_kernel(x_ref, w_ref, b_ref, mu_ref, z_ref, q_ref, acc_ref, *,
                  n_clusters, alpha):
    k = pl.program_id(1)

    @pl.when(k == 0)
    def _():
        acc_ref[...] = jnp.zeros_like(acc_ref)

    # ---- forward(): z = encoder(x), accumulated over D_in tiles (MXU, f32 acc) ----
    acc_ref[...] += jnp.dot(x_ref[...], w_ref[...],
                            preferred_element_type=jnp.float32)

    @pl.when(k == pl.num_programs(1) - 1)
    def _():
        z = acc_ref[...] + b_ref[...]
        z_ref[...] = z.astype(z_ref.dtype)

        # ---- soft_assignemt(): Student-t similarity to cluster centers mu ----
        mu = mu_ref[...].astype(jnp.float32)
        # ||z - mu||^2 = ||z||^2 - 2 z.mu^T + ||mu||^2  (MXU-friendly expansion)
        z2 = jnp.sum(z * z, axis=-1, keepdims=True)                    # [TB, 1]
        mu2 = jnp.sum(mu * mu, axis=-1)[None, :]                       # [1, K_pad]
        cross = jax.lax.dot_general(                                   # [TB, K_pad]
            z.astype(mu_ref.dtype), mu_ref[...],
            (((1,), (1,)), ((), ())), preferred_element_type=jnp.float32)
        d2 = jnp.maximum(z2 - 2.0 * cross + mu2, 0.0)                  # clamp f32 cancellation
        if alpha != 1.0:
            d2 = d2 * (1.0 / alpha)

        base = pl.reciprocal(1.0 + d2, approx=True)                    # EUP slot
        if alpha == 1.0:
            q = base * base                                            # q ** (alpha + 1), alpha == 1
        else:
            q = base ** (alpha + 1.0)

        # Zero the lane-padding clusters before the row normalization.
        if n_clusters < q.shape[1]:
            col = jax.lax.broadcasted_iota(jnp.int32, q.shape, 1)
            q = jnp.where(col < n_clusters, q, 0.0)

        q = q * pl.reciprocal(jnp.sum(q, axis=1, keepdims=True), approx=True)
        q_ref[...] = q.astype(q_ref.dtype)


def unidec_forward(x, w, b, mu, *, alpha=1.0, matmul_dtype=jnp.float32,
                   tile_b=None, tile_k=None,
                   vmem_budget_bytes=48 * 1024 * 1024):
    """Returns (z, q): latent codes and DEC soft cluster assignments."""
    B, D_in = x.shape
    D_z = w.shape[1]
    K = mu.shape[0]
    assert w.shape == (D_in, D_z) and b.shape == (1, D_z) and mu.shape == (K, D_z)

    # Lane-dense cluster axis: pad K (e.g. 10) up to a multiple of 128.
    K_pad = _round_up(max(K, 128), 128)

    in_bytes = jnp.dtype(matmul_dtype).itemsize
    auto_tb, auto_tk = _choose_tiles(B, D_in, D_z, K_pad, in_bytes, vmem_budget_bytes)
    if tile_b is None:
        tile_b = auto_tb
    if tile_k is None:
        tile_k = auto_tk
    tile_b = max(8, _round_up(int(tile_b), 8))
    tile_k = max(128, _round_up(int(tile_k), 128))

    B_pad = _round_up(B, tile_b)
    D_in_pad = _round_up(D_in, tile_k)

    x_p = x
    if B_pad != B or D_in_pad != D_in:
        x_p = jnp.pad(x, ((0, B_pad - B), (0, D_in_pad - D_in)))
    w_p = w if D_in_pad == D_in else jnp.pad(w, ((0, D_in_pad - D_in), (0, 0)))
    mu_p = mu if K_pad == K else jnp.pad(mu, ((0, K_pad - K), (0, 0)))

    # bf16 MXU operands (f32 accumulation) halve x/w DMA bytes; bias and the
    # q/elementwise math stay f32 (VPU/EUP path, incl. v5e which has no bf16 VPU).
    x_p = x_p.astype(matmul_dtype)
    w_p = w_p.astype(matmul_dtype)
    mu_p = mu_p.astype(matmul_dtype)
    b_f32 = b.astype(jnp.float32)

    grid = (B_pad // tile_b, D_in_pad // tile_k)
    kernel = functools.partial(unidec_kernel, n_clusters=K, alpha=float(alpha))

    z_p, q_p = pl.pallas_call(
        kernel,
        out_shape=(
            jax.ShapeDtypeStruct((B_pad, D_z), jnp.float32),
            jax.ShapeDtypeStruct((B_pad, K_pad), jnp.float32),
        ),
        grid=grid,
        in_specs=[
            pl.BlockSpec((tile_b, tile_k), lambda i, k: (i, k)),   # x: batch+reduction tiled
            pl.BlockSpec((tile_k, D_z), lambda i, k: (k, 0)),      # w: reduction tiled
            pl.BlockSpec((1, D_z), lambda i, k: (0, 0)),           # b: resident
            pl.BlockSpec((K_pad, D_z), lambda i, k: (0, 0)),       # mu: resident
        ],
        out_specs=(
            pl.BlockSpec((tile_b, D_z), lambda i, k: (i, 0)),      # resident across k
            pl.BlockSpec((tile_b, K_pad), lambda i, k: (i, 0)),    # resident across k
        ),
        scratch_shapes=[pltpu.VMEM((tile_b, D_z), jnp.float32)],   # z accumulator
        compiler_params=pltpu.CompilerParams(
            dimension_semantics=("parallel", "arbitrary"),         # megacore on batch axis
            vmem_limit_bytes=vmem_budget_bytes,                    # fits v7x's 64 MiB w/ headroom
        ),
    )(x_p, w_p, b_f32, mu_p)

    return z_p[:B], q_p[:B, :K]


def reference(x, w, b, mu, alpha=1.0):
    """Exact f32 reference matching the PyTorch module's math."""
    z = x @ w + b
    d2 = jnp.sum((z[:, None, :] - mu[None, :, :]) ** 2, axis=2)
    q = 1.0 / (1.0 + d2 / alpha)
    q = q ** (alpha + 1.0)
    q = q / jnp.sum(q, axis=1, keepdims=True)
    return z, q


if __name__ == "__main__":
    key = jax.random.PRNGKey(0)
    # Small shapes consistent with the module: batch=64, flattened input dim 256,
    # latent dim 128, n_clusters=10 (module default).
    B, D_in, D_z, K = 64, 256, 128, 10

    kx, kw, kb, km = jax.random.split(key, 4)
    x = jax.random.normal(kx, (B, D_in), dtype=jnp.float32)
    w = jax.random.normal(kw, (D_in, D_z), dtype=jnp.float32) * (1.0 / float(D_in) ** 0.5)
    b = jax.random.normal(kb, (1, D_z), dtype=jnp.float32) * 0.01
    mu = jax.random.normal(km, (K, D_z), dtype=jnp.float32)   # encoder.mu (cluster centers)

    z_ref, q_ref = reference(x, w, b, mu)

    # f32 MXU path; tile_b=16 / tile_k=128 force a (4, 2) grid to exercise both
    # the batch pipelining and the D_in-reduction accumulator at these toy sizes.
    z, q = unidec_forward(x, w, b, mu, matmul_dtype=jnp.float32, tile_b=16, tile_k=128)
    jax.block_until_ready((z, q))
    assert z.shape == (B, D_z) and q.shape == (B, K)
    assert jnp.allclose(z, z_ref, atol=1e-4, rtol=1e-4)
    # q tolerance reflects the EUP approximate reciprocals used in-kernel.
    assert jnp.allclose(q, q_ref, atol=1e-2, rtol=1e-2)
    assert jnp.allclose(jnp.sum(q, axis=1), jnp.ones((B,)), atol=1e-2)

    # bf16 MXU operands with f32 accumulation (perf path on v5e/v6e/v7x),
    # auto tile selection (single k-step at this D_in).
    z_bf, q_bf = unidec_forward(x, w, b, mu, matmul_dtype=jnp.bfloat16)
    jax.block_until_ready((z_bf, q_bf))
    assert z_bf.shape == (B, D_z) and q_bf.shape == (B, K)
    assert jnp.allclose(z_bf, z_ref, atol=5e-2, rtol=5e-2)
    assert jnp.allclose(q_bf, q_ref, atol=2e-2, rtol=2e-2)
    assert jnp.allclose(jnp.sum(q_bf, axis=1), jnp.ones((B,)), atol=2e-2)

    # TODO(synk): the module's training utilities (loss_function, target_distribution,
    # fit_predict / kmeans init) are host-side training logic, not part of forward().
    print("KERNEL_OK")
</pallas_src>

<mosaic_0001>
module attributes {stable_mosaic.version = 11 : i64} {
  func.func @unidec_kernel(%arg0: i32, %arg1: i32, %arg2: memref<16x128xf32, #tpu.memory_space<vmem>>, %arg3: memref<128x128xf32, #tpu.memory_space<vmem>>, %arg4: memref<1x128xf32, #tpu.memory_space<vmem>>, %arg5: memref<128x128xf32, #tpu.memory_space<vmem>>, %arg6: memref<16x128xf32, #tpu.memory_space<vmem>>, %arg7: memref<16x128xf32, #tpu.memory_space<vmem>>, %arg8: memref<16x128xf32, #tpu.memory_space<vmem>>) attributes {dimension_semantics = [#tpu.dimension_semantics<parallel>, #tpu.dimension_semantics<arbitrary>], iteration_bounds = array<i64: 4, 2>, scalar_prefetch = 0 : i64, scratch_operands = 1 : i64, tpu.core_type = #tpu.core_type<tc>, window_params = [{transform_indices = @transform_0, window_bounds = array<i64: 16, 128>}, {transform_indices = @transform_1, window_bounds = array<i64: 128, 128>}, {pipeline_mode = #tpu.pipeline_mode<synchronous>, transform_indices = @transform_2, window_bounds = array<i64: 1, 128>}, {pipeline_mode = #tpu.pipeline_mode<synchronous>, transform_indices = @transform_3, window_bounds = array<i64: 128, 128>}, {transform_indices = @transform_4, window_bounds = array<i64: 16, 128>}, {transform_indices = @transform_5, window_bounds = array<i64: 16, 128>}]} {
    %c0_i32 = arith.constant 0 : i32
    %0 = arith.cmpi eq, %arg1, %c0_i32 : i32
    %1 = arith.extui %0 : i1 to i32
    %c0_i32_0 = arith.constant 0 : i32
    %2 = arith.cmpi ne, %1, %c0_i32_0 : i32
    scf.if %2 {
      %cst_9 = arith.constant 0.000000e+00 : f32
      %12 = vector.broadcast %cst_9 : f32 to vector<16x128xf32>
      %c0_10 = arith.constant 0 : index
      %c0_11 = arith.constant 0 : index
      %13 = vector.load %arg8[%c0_10, %c0_11] : memref<16x128xf32, #tpu.memory_space<vmem>>, vector<16x128xf32>
      tpu.vector_store %arg8[%c0_10, %c0_11], %12 {strides = array<i32>} : memref<16x128xf32, #tpu.memory_space<vmem>>, vector<16x128xf32>,
    } else {
    }
    %c0 = arith.constant 0 : index
    %c0_1 = arith.constant 0 : index
    %3 = vector.load %arg8[%c0, %c0_1] : memref<16x128xf32, #tpu.memory_space<vmem>>, vector<16x128xf32>
    %c0_2 = arith.constant 0 : index
    %c0_3 = arith.constant 0 : index
    %4 = vector.load %arg2[%c0_2, %c0_3] : memref<16x128xf32, #tpu.memory_space<vmem>>, vector<16x128xf32>
    %c0_4 = arith.constant 0 : index
    %c0_5 = arith.constant 0 : index
    %5 = vector.load %arg3[%c0_4, %c0_5] : memref<128x128xf32, #tpu.memory_space<vmem>>, vector<128x128xf32>
    %cst = arith.constant dense<0.000000e+00> : vector<16x128xf32>
    %6 = tpu.matmul %4, %5, %cst {dimension_numbers = #tpu.dot_dimension_numbers<[1], [0], [0], [1], [0, 0, 1, 1], [], []>} : vector<16x128xf32>, vector<128x128xf32>, vector<16x128xf32> -> vector<16x128xf32>
    %7 = arith.addf %3, %6 : vector<16x128xf32>
    %c0_6 = arith.constant 0 : index
    %c0_7 = arith.constant 0 : index
    %8 = vector.load %arg8[%c0_6, %c0_7] : memref<16x128xf32, #tpu.memory_space<vmem>>, vector<16x128xf32>
    tpu.vector_store %arg8[%c0_6, %c0_7], %7 {strides = array<i32>} : memref<16x128xf32, #tpu.memory_space<vmem>>, vector<16x128xf32>,
    %c1_i32 = arith.constant 1 : i32
    %9 = arith.cmpi eq, %arg1, %c1_i32 : i32
    %10 = arith.extui %9 : i1 to i32
    %c0_i32_8 = arith.constant 0 : i32
    %11 = arith.cmpi ne, %10, %c0_i32_8 : i32
    scf.if %11 {
      %c0_9 = arith.constant 0 : index
      %c0_10 = arith.constant 0 : index
      %12 = vector.load %arg8[%c0_9, %c0_10] : memref<16x128xf32, #tpu.memory_space<vmem>>, vector<16x128xf32>
      %c0_11 = arith.constant 0 : index
      %c0_12 = arith.constant 0 : index
      %13 = vector.load %arg4[%c0_11, %c0_12] : memref<1x128xf32, #tpu.memory_space<vmem>>, vector<1x128xf32>
      %14 = vector.broadcast %13 : vector<1x128xf32> to vector<16x128xf32>
      %15 = arith.addf %12, %14 : vector<16x128xf32>
      %c0_13 = arith.constant 0 : index
      %c0_14 = arith.constant 0 : index
      %16 = vector.load %arg6[%c0_13, %c0_14] : memref<16x128xf32, #tpu.memory_space<vmem>>, vector<16x128xf32>
      tpu.vector_store %arg6[%c0_13, %c0_14], %15 {strides = array<i32>} : memref<16x128xf32, #tpu.memory_space<vmem>>, vector<16x128xf32>,
      %c0_15 = arith.constant 0 : index
      %c0_16 = arith.constant 0 : index
      %17 = vector.load %arg5[%c0_15, %c0_16] : memref<128x128xf32, #tpu.memory_space<vmem>>, vector<128x128xf32>
      %18 = arith.mulf %15, %15 : vector<16x128xf32>
      %cst_17 = arith.constant dense<0.000000e+00> : vector<16xf32>
      %19 = vector.multi_reduction <add>, %18, %cst_17 [1] : vector<16x128xf32> to vector<16xf32>
      %20 = vector.shape_cast %19 : vector<16xf32> to vector<16x1xf32>
      %21 = arith.mulf %17, %17 : vector<128x128xf32>
      %cst_18 = arith.constant dense<0.000000e+00> : vector<128xf32>
      %22 = vector.multi_reduction <add>, %21, %cst_18 [1] : vector<128x128xf32> to vector<128xf32>
      %23 = vector.shape_cast %22 : vector<128xf32> to vector<1x128xf32>
      %c0_19 = arith.constant 0 : index
      %c0_20 = arith.constant 0 : index
      %24 = vector.load %arg5[%c0_19, %c0_20] : memref<128x128xf32, #tpu.memory_space<vmem>>, vector<128x128xf32>
      %cst_21 = arith.constant dense<0.000000e+00> : vector<16x128xf32>
      %25 = tpu.matmul %15, %24, %cst_21 {dimension_numbers = #tpu.dot_dimension_numbers<[1], [1], [0], [0], [0, 0, 1, 0], [], []>} : vector<16x128xf32>, vector<128x128xf32>, vector<16x128xf32> -> vector<16x128xf32>
      %cst_22 = arith.constant 2.000000e+00 : f32
      %26 = vector.broadcast %cst_22 : f32 to vector<16x128xf32>
      %27 = arith.mulf %26, %25 : vector<16x128xf32>
      %28 = vector.broadcast %20 : vector<16x1xf32> to vector<16x128xf32>
      %29 = arith.subf %28, %27 : vector<16x128xf32>
      %30 = vector.broadcast %23 : vector<1x128xf32> to vector<16x128xf32>
      %31 = arith.addf %29, %30 : vector<16x128xf32>
      %cst_23 = arith.constant 0.000000e+00 : f32
      %32 = vector.broadcast %cst_23 : f32 to vector<16x128xf32>
      %33 = arith.maximumf %31, %32 : vector<16x128xf32>
      %cst_24 = arith.constant 1.000000e+00 : f32
      %34 = vector.broadcast %cst_24 : f32 to vector<16x128xf32>
      %35 = arith.addf %34, %33 : vector<16x128xf32>
      %36 = tpu.reciprocal %35 {approx = true} : vector<16x128xf32> -> vector<16x128xf32>
      %37 = arith.mulf %36, %36 : vector<16x128xf32>
      %38 = tpu.iota {dimensions = array<i32: 1>} : vector<16x128xi32>
      %c10_i32 = arith.constant 10 : i32
      %39 = vector.broadcast %c10_i32 : i32 to vector<16x128xi32>
      %40 = arith.cmpi slt, %38, %39 : vector<16x128xi32>
      %cst_25 = arith.constant 0.000000e+00 : f32
      %41 = vector.broadcast %cst_25 : f32 to vector<16x128xf32>
      %42 = arith.select %40, %37, %41 : vector<16x128xi1>, vector<16x128xf32>
      %cst_26 = arith.constant dense<0.000000e+00> : vector<16xf32>
      %43 = vector.multi_reduction <add>, %42, %cst_26 [1] : vector<16x128xf32> to vector<16xf32>
      %44 = vector.shape_cast %43 : vector<16xf32> to vector<16x1xf32>
      %45 = tpu.reciprocal %44 {approx = true} : vector<16x1xf32> -> vector<16x1xf32>
      %46 = vector.broadcast %45 : vector<16x1xf32> to vector<16x128xf32>
      %47 = arith.mulf %42, %46 : vector<16x128xf32>
      %c0_27 = arith.constant 0 : index
      %c0_28 = arith.constant 0 : index
      %48 = vector.load %arg7[%c0_27, %c0_28] : memref<16x128xf32, #tpu.memory_space<vmem>>, vector<16x128xf32>
      tpu.vector_store %arg7[%c0_27, %c0_28], %47 {strides = array<i32>} : memref<16x128xf32, #tpu.memory_space<vmem>>, vector<16x128xf32>,
    } else {
    }
    return
  }
  func.func @transform_0(%arg0: i32, %arg1: i32) -> (i32, i32) {
    %c0_i32 = arith.constant 0 : i32
    return %arg0, %arg1 : i32, i32
  }
  func.func @transform_1(%arg0: i32, %arg1: i32) -> (i32, i32) {
    %c0_i32 = arith.constant 0 : i32
    %c0_i32_0 = arith.constant 0 : i32
    return %arg1, %c0_i32 : i32, i32
  }
  func.func @transform_2(%arg0: i32, %arg1: i32) -> (i32, i32) {
    %c0_i32 = arith.constant 0 : i32
    %c0_i32_0 = arith.constant 0 : i32
    %c0_i32_1 = arith.constant 0 : i32
    return %c0_i32, %c0_i32_0 : i32, i32
  }
  func.func @transform_3(%arg0: i32, %arg1: i32) -> (i32, i32) {
    %c0_i32 = arith.constant 0 : i32
    %c0_i32_0 = arith.constant 0 : i32
    %c0_i32_1 = arith.constant 0 : i32
    return %c0_i32, %c0_i32_0 : i32, i32
  }
  func.func @transform_4(%arg0: i32, %arg1: i32) -> (i32, i32) {
    %c0_i32 = arith.constant 0 : i32
    %c0_i32_0 = arith.constant 0 : i32
    return %arg0, %c0_i32 : i32, i32
  }
  func.func @transform_5(%arg0: i32, %arg1: i32) -> (i32, i32) {
    %c0_i32 = arith.constant 0 : i32
    %c0_i32_0 = arith.constant 0 : i32
    return %arg0, %c0_i32 : i32, i32
  }
}

</mosaic_0001>

<llo_original>
// kernel: tpu_custom_call.1
$region0: #{tpu_custom_call.1}
  #allocation0 [shape = 'u32[]', space=smem, size = 0x4, offset = 0x4, fixed_abs, tag = 'smem constant byte address 0x4 - core index']
  #allocation1 [shape = 'u32[144,128]{1,0:T(1,128)}', space=vmem, size = 0x12000, scoped, tag = 'internal scratch']
  #allocation2 [shape = 'f32[16,128]{1,0:T(8,128)}', space=vmem, size = 0x2000, scoped, tag = 'scratch operand']
  %s0 = inlined_call_operand.hbm [shape: f32[64,256], index: 0, kind: input, shape index: {}]
  %s1 = inlined_call_operand.hbm [shape: f32[256,128], index: 1, kind: input, shape index: {}]
  %s2 = inlined_call_operand.vmem [shape: f32[1,128], index: 2, kind: input, shape index: {}]
  %s3 = inlined_call_operand.hbm [shape: f32[128,128], index: 3, kind: input, shape index: {}]
  %s4 = inlined_call_operand.hbm [shape: f32[64,128], index: 4, kind: output, shape index: {0}]
  %s5 = inlined_call_operand.hbm [shape: f32[64,128], index: 5, kind: output, shape index: {1}]
  %6 = xla_tuple %s4, %s5
  %s7 = sld [smem:[#allocation0]]
  $region77: #{tpu_custom_call.1} parent=0
    _
  %s9 = ssub.s32 1, %s7
  %s10 = scalar_select 0, %s9, %s7
  $region1: #{tpu_custom_call.1} parent=0
    #allocation3 [shape = 'u8[16384]{0}', space=vmem, size = 0x4000, scoped, tag = 'input window, operand 0']
    #allocation4 [shape = 's32[2]{0}', space=sflag, size = 0x8, scoped, tag = 'scoped memory for tpu_custom_call.1']
    #allocation5 [shape = 's32[2]{0}', space=sflag, size = 0x8, scoped, tag = 'scoped memory for tpu_custom_call.1']
    #allocation6 [shape = 'u8[131072]{0}', space=vmem, size = 0x20000, scoped, tag = 'input window, operand 1']
    #allocation7 [shape = 's32[2]{0}', space=sflag, size = 0x8, scoped, tag = 'scoped memory for tpu_custom_call.1']
    #allocation8 [shape = 'u8[65536]{0}', space=vmem, size = 0x10000, scoped, tag = 'input window, operand 3, single buffered']
    #allocation9 [shape = 'u8[16384]{0}', space=vmem, size = 0x4000, scoped, tag = 'output window, operand 0']
    #allocation10 [shape = 'u8[16384]{0}', space=vmem, size = 0x4000, scoped, tag = 'output window, operand 1']
    #allocation11 [shape = 's32[2]{0}', space=sflag, size = 0x8, scoped, tag = 'scoped memory for tpu_custom_call.1']
    %11 = vsyncpa [#allocation4], 0
    %s12 = scalar_lea.sflag [#allocation4], 1
    %13 = vsyncpa %s12, 0
    %14 = vsyncpa [#allocation7], 0
    %s15 = scalar_lea.sflag [#allocation7], 1
    %16 = vsyncpa %s15, 0
    %17 = vsyncpa [#allocation5], 0
    %s18 = scalar_lea.sflag [#allocation5], 1
    %19 = vsyncpa %s18, 0
    %20 = vsyncpa [#allocation11], 0
    %s21 = scalar_lea.sflag [#allocation11], 1
    %22 = vsyncpa %s21, 0
    loop: start=0, step=1, limit=10
    $region2: #{tpu_custom_call.1} parent=1 // loop_pre_header
      _
    $region3: #{tpu_custom_call.1} parent=1 // loop_header
      %s24 = sphi 0, %s28
      %p25 = scmp.ge.s32.totalorder %s24, 10
      %s31 = sphi 0, %s43
      %s32 = sphi 0, %s39
      %s33 = sphi 0, %s31
      %s34 = sphi 0, %s32
      %s35 = sphi 0, %s33
      %s36 = sphi 0, %s34
      %s48 = sphi 0, %s50
      %s51 = sphi 0, %s48
      %s52 = sphi 0, %s51
      %s68 = sphi 0, %s52
      %s74 = sphi 0, %s76
      %s77 = sphi 0, %s74
      %s78 = sphi 0, %s77
      %s94 = sphi 0, %s78
      %s98 = sphi 0, %s98
      %s100 = sphi 0, %s98
      %s101 = sphi 0, %s100
      %s115 = sphi 0, %s101
      %s119 = sphi 0, %s119
      %s121 = sphi 0, %s119
      %s122 = sphi 0, %s121
      %s136 = sphi 0, %s122
      %s142 = sphi 0, %s144
      %s145 = sphi 0, %s142
      %s146 = sphi 0, %s145
      %s162 = sphi 0, %s146
      %s168 = sphi 0, %s170
      %s171 = sphi 0, %s168
      %s172 = sphi 0, %s171
      %s188 = sphi 0, %s172
    $region4: #{tpu_custom_call.1} parent=1 // loop_header_branch
      %27 = sbr.rel (%p25) target = $region8
    $region5: #{tpu_custom_call.1} parent=1 // loop_body
      %s29 = ssub.s32 %s24, 1
      %s30 = ssub.s32 %s24, 2
      %s37 = sadd.s32 1, %s32
      %p38 = scmp.ge.s32.totalorder %s37, 2
      %s39 = scalar_select %p38, 0, %s37
      %s40 = sadd.s32 1, %s31
      %s41 = scalar_select %p38, %s40, %s31
      %p42 = scmp.ge.s32.totalorder %s41, 4
      %s43 = scalar_select %p42, 0, %s41
      %s44 = ssub.s32 %s31, %s43
      %s45 = ssub.s32 %s32, %s39
      %s46 = sor.u32 %s44, %s45
      %p47 = scmp.eq.s32.totalorder %s46, 0
      %s49 = sadd.s32 %s48, 1
      %s50 = scalar_select %p47, %s48, %s49
      %p53 = pneg %p47
      %p54 = scmp.eq.s32.totalorder %s24, 7
      %p55 = por %p53, %p54
      %p56 = scmp.ne.s32.totalorder %s48, %s51
      %p57 = scmp.eq.s32.totalorder %s24, 0
      %p58 = por %p56, %p57
      %p59 = scmp.ne.s32.totalorder %s48, %s51
      %p60 = scmp.eq.s32.totalorder %s29, 7
      %p61 = por %p59, %p60
      %p62 = scmp.ne.s32.totalorder %s51, %s52
      %p63 = scmp.eq.s32.totalorder %s29, 0
      %p64 = por %p62, %p63
      %p65 = scmp.ne.s32.totalorder %s51, %s52
      %p66 = scmp.eq.s32.totalorder %s30, 7
      %p67 = por %p65, %p66
      %p69 = scmp.ne.s32.totalorder %s52, %s68
      %p70 = scmp.eq.s32.totalorder %s30, 0
      %p71 = por %p69, %p70
      %s72 = ssub.s32 %s32, %s39
      %p73 = scmp.eq.s32.totalorder %s72, 0
      %s75 = sadd.s32 %s74, 1
      %s76 = scalar_select %p73, %s74, %s75
      %p79 = pneg %p73
      %p80 = scmp.eq.s32.totalorder %s24, 7
      %p81 = por %p79, %p80
      %p82 = scmp.ne.s32.totalorder %s74, %s77
      %p83 = scmp.eq.s32.totalorder %s24, 0
      %p84 = por %p82, %p83
      %p85 = scmp.ne.s32.totalorder %s74, %s77
      %p86 = scmp.eq.s32.totalorder %s29, 7
      %p87 = por %p85, %p86
      %p88 = scmp.ne.s32.totalorder %s77, %s78
      %p89 = scmp.eq.s32.totalorder %s29, 0
      %p90 = por %p88, %p89
      %p91 = scmp.ne.s32.totalorder %s77, %s78
      %p92 = scmp.eq.s32.totalorder %s30, 7
      %p93 = por %p91, %p92
      %p95 = scmp.ne.s32.totalorder %s78, %s94
      %p96 = scmp.eq.s32.totalorder %s30, 0
      %p97 = por %p95, %p96
      %s99 = sadd.s32 %s98, 1
      %p102 = scmp.eq.s32.totalorder %s24, 7
      %p103 = scmp.ne.s32.totalorder %s98, %s100
      %p104 = scmp.eq.s32.totalorder %s24, 0
      %p105 = por %p103, %p104
      %p106 = scmp.ne.s32.totalorder %s98, %s100
      %p107 = scmp.eq.s32.totalorder %s29, 7
      %p108 = por %p106, %p107
      %p109 = scmp.ne.s32.totalorder %s100, %s101
      %p110 = scmp.eq.s32.totalorder %s29, 0
      %p111 = por %p109, %p110
      %p112 = scmp.ne.s32.totalorder %s100, %s101
      %p113 = scmp.eq.s32.totalorder %s30, 7
      %p114 = por %p112, %p113
      %p116 = scmp.ne.s32.totalorder %s101, %s115
      %p117 = scmp.eq.s32.totalorder %s30, 0
      %p118 = por %p116, %p117
      %s120 = sadd.s32 %s119, 1
      %p123 = scmp.eq.s32.totalorder %s24, 7
      %p124 = scmp.ne.s32.totalorder %s119, %s121
      %p125 = scmp.eq.s32.totalorder %s24, 0
      %p126 = por %p124, %p125
      %p127 = scmp.ne.s32.totalorder %s119, %s121
      %p128 = scmp.eq.s32.totalorder %s29, 7
      %p129 = por %p127, %p128
      %p130 = scmp.ne.s32.totalorder %s121, %s122
      %p131 = scmp.eq.s32.totalorder %s29, 0
      %p132 = por %p130, %p131
      %p133 = scmp.ne.s32.totalorder %s121, %s122
      %p134 = scmp.eq.s32.totalorder %s30, 7
      %p135 = por %p133, %p134
      %p137 = scmp.ne.s32.totalorder %s122, %s136
      %p138 = scmp.eq.s32.totalorder %s30, 0
      %p139 = por %p137, %p138
      %s140 = ssub.s32 %s31, %s43
      %p141 = scmp.eq.s32.totalorder %s140, 0
      %s143 = sadd.s32 %s142, 1
      %s144 = scalar_select %p141, %s142, %s143
      %p147 = pneg %p141
      %p148 = scmp.eq.s32.totalorder %s24, 7
      %p149 = por %p147, %p148
      %p150 = scmp.ne.s32.totalorder %s142, %s145
      %p151 = scmp.eq.s32.totalorder %s24, 0
      %p152 = por %p150, %p151
      %p153 = scmp.ne.s32.totalorder %s142, %s145
      %p154 = scmp.eq.s32.totalorder %s29, 7
      %p155 = por %p153, %p154
      %p156 = scmp.ne.s32.totalorder %s145, %s146
      %p157 = scmp.eq.s32.totalorder %s29, 0
      %p158 = por %p156, %p157
      %p159 = scmp.ne.s32.totalorder %s145, %s146
      %p160 = scmp.eq.s32.totalorder %s30, 7
      %p161 = por %p159, %p160
      %p163 = scmp.ne.s32.totalorder %s146, %s162
      %p164 = scmp.eq.s32.totalorder %s30, 0
      %p165 = por %p163, %p164
      %s166 = ssub.s32 %s31, %s43
      %p167 = scmp.eq.s32.totalorder %s166, 0
      %s169 = sadd.s32 %s168, 1
      %s170 = scalar_select %p167, %s168, %s169
      %p173 = pneg %p167
      %p174 = scmp.eq.s32.totalorder %s24, 7
      %p175 = por %p173, %p174
      %p176 = scmp.ne.s32.totalorder %s168, %s171
      %p177 = scmp.eq.s32.totalorder %s24, 0
      %p178 = por %p176, %p177
      %p179 = scmp.ne.s32.totalorder %s168, %s171
      %p180 = scmp.eq.s32.totalorder %s29, 7
      %p181 = por %p179, %p180
      %p182 = scmp.ne.s32.totalorder %s171, %s172
      %p183 = scmp.eq.s32.totalorder %s29, 0
      %p184 = por %p182, %p183
      %p185 = scmp.ne.s32.totalorder %s171, %s172
      %p186 = scmp.eq.s32.totalorder %s30, 7
      %p187 = por %p185, %p186
      %p189 = scmp.ne.s32.totalorder %s172, %s188
      %p190 = scmp.eq.s32.totalorder %s30, 0
      %p191 = por %p189, %p190
      %p192 = scmp.le.s32.totalorder 1, %s24
      %p193 = scmp.lt.s32.totalorder %s24, 9
      %p194 = pnand %p192, %p193
      %p195 = pneg %p194
      // Predicated region
      $region9: #{tpu_custom_call.1} parent=5 // pred_check
        _
      $region10: #{tpu_custom_call.1} parent=5 // pred_check_branch
        %197 = sbr.rel (%p194) target = $region12
      $region11: #{tpu_custom_call.1} parent=5 // pred_region
        %s198 = ssub.s32 %s24, 1
        // Predicated region
        $region13: #{tpu_custom_call.1} parent=11 // pred_check
          %p199 = pneg %p111
        $region14: #{tpu_custom_call.1} parent=11 // pred_check_branch
          %201 = sbr.rel (%p199) target = $region16
        $region15: #{tpu_custom_call.1} parent=11 // pred_region
          _
        $region16: #{tpu_custom_call.1} parent=11 // pred_fallthru
          _
        // Predicated region
        $region17: #{tpu_custom_call.1} parent=11 // pred_check
          %p202 = pneg %p132
        $region18: #{tpu_custom_call.1} parent=11 // pred_check_branch
          %204 = sbr.rel (%p202) target = $region20
        $region19: #{tpu_custom_call.1} parent=11 // pred_region
          %s206 = ssub.s32 2048, 2048
          %207 = vsyncadd [#allocation7], %s206
          %s208 = sshll.u32 [#allocation8], 4
          %s209 = int_to_ptr.vmem [resolvable:$true] %s208
          %214 = dma.hbm_to_vmem [thread:$0]  %s3, 2048, %s209, [#allocation7], 128, 128, 8
        $region20: #{tpu_custom_call.1} parent=11 // pred_fallthru
          _
      $region12: #{tpu_custom_call.1} parent=5 // pred_fallthru
        _
      %p215 = scmp.lt.s32.totalorder %s24, 8
      // Predicated region
      $region21: #{tpu_custom_call.1} parent=5 // pred_check
        %p216 = pneg %p215
      $region22: #{tpu_custom_call.1} parent=5 // pred_check_branch
        %218 = sbr.rel (%p216) target = $region24
      $region23: #{tpu_custom_call.1} parent=5 // pred_region
        // Predicated region
        $region25: #{tpu_custom_call.1} parent=23 // pred_check
          %p219 = pneg %p58
        $region26: #{tpu_custom_call.1} parent=23 // pred_check_branch
          %221 = sbr.rel (%p219) target = $region28
        $region27: #{tpu_custom_call.1} parent=23 // pred_region
          %s222 = sand.u32 %s48, 1
          %s223 = scalar_lea.sflag [#allocation4], %s222
          %s224 = sand.u32 %s48, 1
          %s225 = smul.addr %s224, 16
          %s226 = scalar_lea.vmem [#allocation3], %s225
          %s227 = smul.u32 2, %s31
          %s229 = ssub.s32 256, 256
          %230 = vsyncadd %s223, %s229
          %s231 = smul.addr %s227, 2
          %s232 = sadd.s32 %s32, %s231
          %s233 = smul.addr %s232, 128
          %s234 = scalar_lea.hbm %s0, %s233
          %s235 = sshll.u32 %s226, 4
          %s236 = int_to_ptr.vmem [resolvable:$true] %s235
          %241 = dma.hbm_to_vmem [thread:$0]  %s234, 256, %s236, %s223, 256, 128, 8
        $region28: #{tpu_custom_call.1} parent=23 // pred_fallthru
          _
        // Predicated region
        $region29: #{tpu_custom_call.1} parent=23 // pred_check
          %p242 = pneg %p84
        $region30: #{tpu_custom_call.1} parent=23 // pred_check_branch
          %244 = sbr.rel (%p242) target = $region32
        $region31: #{tpu_custom_call.1} parent=23 // pred_region
          %s245 = sand.u32 %s24, 1
          %s246 = scalar_lea.sflag [#allocation7], %s245
          %s247 = sand.u32 %s74, 1
          %s248 = smul.addr %s247, 128
          %s249 = scalar_lea.vmem [#allocation6], %s248
          %s250 = smul.u32 16, %s32
          %s252 = ssub.s32 2048, 2048
          %253 = vsyncadd %s246, %s252
          %s254 = smul.addr %s250, 128
          %s255 = scalar_lea.hbm %s1, %s254
          %s256 = sshll.u32 %s249, 4
          %s257 = int_to_ptr.vmem [resolvable:$true] %s256
          %262 = dma.hbm_to_vmem [thread:$0]  %s255, 2048, %s257, %s246, 128, 128, 8
        $region32: #{tpu_custom_call.1} parent=23 // pred_fallthru
          _
      $region24: #{tpu_custom_call.1} parent=5 // pred_fallthru
        _
      %p263 = scmp.le.s32.totalorder 1, %s24
      %p264 = scmp.lt.s32.totalorder %s24, 9
      %p265 = pnand %p263, %p264
      %p266 = pneg %p265
      // Predicated region
      $region33: #{tpu_custom_call.1} parent=5 // pred_check
        _
      $region34: #{tpu_custom_call.1} parent=5 // pred_check_branch
        %268 = sbr.rel (%p265) target = $region36
      $region35: #{tpu_custom_call.1} parent=5 // pred_region
        %s269 = ssub.s32 %s24, 1
        %s270 = sand.u32 %s51, 1
        %s271 = scalar_lea.sflag [#allocation4], %s270
        %s272 = sand.u32 %s51, 1
        %s273 = smul.addr %s272, 16
        %s274 = scalar_lea.vmem [#allocation3], %s273
        // Predicated region
        $region37: #{tpu_custom_call.1} parent=35 // pred_check
          %p275 = pneg %p64
        $region38: #{tpu_custom_call.1} parent=35 // pred_check_branch
          %277 = sbr.rel (%p275) target = $region40
        $region39: #{tpu_custom_call.1} parent=35 // pred_region
          %278 = dma.done %s271, 256
        $region40: #{tpu_custom_call.1} parent=35 // pred_fallthru
          _
        %s279 = sand.u32 %s29, 1
        %s280 = scalar_lea.sflag [#allocation7], %s279
        %s281 = sand.u32 %s77, 1
        %s282 = smul.addr %s281, 128
        %s283 = scalar_lea.vmem [#allocation6], %s282
        // Predicated region
        $region41: #{tpu_custom_call.1} parent=35 // pred_check
          %p284 = pneg %p90
        $region42: #{tpu_custom_call.1} parent=35 // pred_check_branch
          %286 = sbr.rel (%p284) target = $region44
        $region43: #{tpu_custom_call.1} parent=35 // pred_region
          %287 = dma.done %s280, 2048
        $region44: #{tpu_custom_call.1} parent=35 // pred_fallthru
          _
        // Predicated region
        $region45: #{tpu_custom_call.1} parent=35 // pred_check
          %p288 = pneg %p132
        $region46: #{tpu_custom_call.1} parent=35 // pred_check_branch
          %290 = sbr.rel (%p288) target = $region48
        $region47: #{tpu_custom_call.1} parent=35 // pred_region
          %291 = dma.done [#allocation7], 2048
        $region48: #{tpu_custom_call.1} parent=35 // pred_fallthru
          _
        %s292 = sand.u32 %s51, 1
        %s293 = scalar_lea.sflag [#allocation4], %s292
        %s294 = sand.u32 %s51, 1
        %s295 = smul.addr %s294, 16
        %s296 = scalar_lea.vmem [#allocation3], %s295
        %p297 = pneg %p64
        %p298 = pneg %p61
        %s299 = sand.u32 %s29, 1
        %s300 = scalar_lea.sflag [#allocation7], %s299
        %s301 = sand.u32 %s77, 1
        %s302 = smul.addr %s301, 128
        %s303 = scalar_lea.vmem [#allocation6], %s302
        %p304 = pneg %p90
        %p305 = pneg %p87
        %p306 = pneg %p111
        %p307 = pneg %p108
        %p308 = pneg %p132
        %p309 = pneg %p129
        %p310 = pneg %p158
        %p311 = pneg %p155
        %s312 = sand.u32 %s145, 1
        %s313 = scalar_lea.sflag [#allocation5], %s312
        %s314 = sand.u32 %s145, 1
        %s315 = smul.addr %s314, 16
        %s316 = scalar_lea.vmem [#allocation9], %s315
        %p317 = pneg %p184
        %p318 = pneg %p181
        %s319 = sand.u32 %s171, 1
        %s320 = scalar_lea.sflag [#allocation11], %s319
        %s321 = sand.u32 %s171, 1
        %s322 = smul.addr %s321, 16
        %s323 = scalar_lea.vmem [#allocation10], %s322
        %s324 = smul.u32 2, %s33
        %s325 = smul.u32 16, %s34
        %s326 = smul.u32 2, %s33
        %s327 = smul.u32 2, %s33
        %p328 = scmp.eq.s32.totalorder %s34, 0
        // Predicated region
        $region49: #{tpu_custom_call.1} parent=35 // pred_check
          %p329 = pneg %p328
        $region50: #{tpu_custom_call.1} parent=35 // pred_check_branch
          %331 = sbr.rel (%p329) target = $region52
        $region51: #{tpu_custom_call.1} parent=35 // pred_region
          %332 = vst [vmem:[#allocation2] sm:$0xff] 0.0
          %333 = vst [vmem:[#allocation2 + $0x8] sm:$0xff] 0.0
        $region52: #{tpu_custom_call.1} parent=35 // pred_fallthru
          _
        %v334 = vld [vmem:[#allocation2] sm:$0xff]
        %v335 = vld [vmem:[#allocation2 + $0x8] sm:$0xff]
        %v336 = vld [vmem:[%s274] sm:$0xff]
        %v337 = vld [vmem:[%s274 + $0x8] sm:$0xff]
        %v338 = vld [vmem:[%s283] sm:$0xff]
        %v339 = vld [vmem:[%s283 + $0x8] sm:$0xff]
        %v340 = vld [vmem:[%s283 + $0x10] sm:$0xff]
        %v341 = vld [vmem:[%s283 + $0x18] sm:$0xff]
        %v342 = vld [vmem:[%s283 + $0x20] sm:$0xff]
        %v343 = vld [vmem:[%s283 + $0x28] sm:$0xff]
        %v344 = vld [vmem:[%s283 + $0x30] sm:$0xff]
        %v345 = vld [vmem:[%s283 + $0x38] sm:$0xff]
        %v346 = vld [vmem:[%s283 + $0x40] sm:$0xff]
        %v347 = vld [vmem:[%s283 + $0x48] sm:$0xff]
        %v348 = vld [vmem:[%s283 + $0x50] sm:$0xff]
        %v349 = vld [vmem:[%s283 + $0x58] sm:$0xff]
        %v350 = vld [vmem:[%s283 + $0x60] sm:$0xff]
        %v351 = vld [vmem:[%s283 + $0x68] sm:$0xff]
        %v352 = vld [vmem:[%s283 + $0x70] sm:$0xff]
        %v353 = vld [vmem:[%s283 + $0x78] sm:$0xff]
        %354 = vmatprep.subr.mxu0 0.0
        %355 = vmatpush1.msra.mxu0 %v353
        %356 = vmatprep.subr.mxu0 0.0
        %357 = vmatpush1.msra.mxu0 %v352
        %358 = vmatprep.subr.mxu0 0.0
        %359 = vmatpush1.msra.mxu0 %v351
        %360 = vmatprep.subr.mxu0 0.0
        %361 = vmatpush1.msra.mxu0 %v350
        %362 = vmatprep.subr.mxu0 0.0
        %363 = vmatpush1.msra.mxu0 %v349
        %364 = vmatprep.subr.mxu0 0.0
        %365 = vmatpush1.msra.mxu0 %v348
        %366 = vmatprep.subr.mxu0 0.0
        %367 = vmatpush1.msra.mxu0 %v347
        %368 = vmatprep.subr.mxu0 0.0
        %369 = vmatpush1.msra.mxu0 %v346
        %370 = vmatprep.subr.mxu0 0.0
        %371 = vmatpush1.msra.mxu0 %v345
        %372 = vmatprep.subr.mxu0 0.0
        %373 = vmatpush1.msra.mxu0 %v344
        %374 = vmatprep.subr.mxu0 0.0
        %375 = vmatpush1.msra.mxu0 %v343
        %376 = vmatprep.subr.mxu0 0.0
        %377 = vmatpush1.msra.mxu0 %v342
        %378 = vmatprep.subr.mxu0 0.0
        %379 = vmatpush1.msra.mxu0 %v341
        %380 = vmatprep.subr.mxu0 0.0
        %381 = vmatpush1.msra.mxu0 %v340
        %382 = vmatprep.subr.mxu0 0.0
        %383 = vmatpush1.msra.mxu0 %v339
        %384 = vmatprep.subr.mxu0 0.0
        %385 = vmatpush1.msra.mxu0 %v338
        %386 = vmatprep.subr.mxu0 0.0
        %387 = vmatpush2.msra.mxu0 0.0
        %388 = vmatprep.subr.mxu0 0.0
        %389 = vmatpush2.msra.mxu0 0.0
        %390 = vmatprep.subr.mxu0 0.0
        %391 = vmatpush2.msra.mxu0 0.0
        %392 = vmatprep.subr.mxu0 0.0
        %393 = vmatpush2.msra.mxu0 0.0
        %394 = vmatprep.subr.mxu0 0.0
        %395 = vmatpush2.msra.mxu0 0.0
        %396 = vmatprep.subr.mxu0 0.0
        %397 = vmatpush2.msra.mxu0 0.0
        %398 = vmatprep.subr.mxu0 0.0
        %399 = vmatpush2.msra.mxu0 0.0
        %400 = vmatprep.subr.mxu0 0.0
        %401 = vmatpush2.msra.mxu0 0.0
        %402 = vmatprep.subr.mxu0 0.0
        %403 = vmatpush2.msra.mxu0 0.0
        %404 = vmatprep.subr.mxu0 0.0
        %405 = vmatpush2.msra.mxu0 0.0
        %406 = vmatprep.subr.mxu0 0.0
        %407 = vmatpush2.msra.mxu0 0.0
        %408 = vmatprep.subr.mxu0 0.0
        %409 = vmatpush2.msra.mxu0 0.0
        %410 = vmatprep.subr.mxu0 0.0
        %411 = vmatpush2.msra.mxu0 0.0
        %412 = vmatprep.subr.mxu0 0.0
        %413 = vmatpush2.msra.mxu0 0.0
        %414 = vmatprep.subr.mxu0 0.0
        %415 = vmatpush2.msra.mxu0 0.0
        %416 = vmatprep.subr.mxu0 0.0
        %417 = vmatpush2.msra.mxu0 0.0
        %418 = vmatprep.mubr.f32.mxu0 0.0
        %419 = vmatmul.mubr.f32.gmra.mxu0 %v336
        %v420 = vpop.f32.mrf.mxu0
        %v421 = vadd.f32 0.0, %v420
        %v422 = vpop.f32.mrf.mxu0
        %423 = vmatprep.mubr.f32.mxu0 0.0
        %424 = vmatmul.mubr.f32.gmra.mxu0 %v337
        %v425 = vpop.f32.mrf.mxu0
        %v426 = vadd.f32 0.0, %v425
        %v427 = vpop.f32.mrf.mxu0
        %428 = vdwg.mxu0
        %v429 = vadd.f32 %v334, %v421
        %v430 = vadd.f32 %v335, %v426
        %431 = vst [vmem:[#allocation2] sm:$0xff] %v429
        %432 = vst [vmem:[#allocation2 + $0x8] sm:$0xff] %v430
        %p433 = scmp.eq.s32.totalorder %s34, 1
        // Predicated region
        $region53: #{tpu_custom_call.1} parent=35 // pred_check
          %p434 = pneg %p433
        $region54: #{tpu_custom_call.1} parent=35 // pred_check_branch
          %436 = sbr.rel (%p434) target = $region56
        $region55: #{tpu_custom_call.1} parent=35 // pred_region
          %v437 = vld [vmem:[#allocation2] sm:$0xff]
          %v438 = vld [vmem:[#allocation2 + $0x8] sm:$0xff]
          %v439 = vld [vmem:[%s2] sm:$0x1]
          %v441 = vlaneseq
          %v442 = vshrl.u32 %v441, 7
          %v443 = vsub.s32 0, %v442
          %v444 = vrot.slane %v439, %v443
          %v446 = vadd.f32 %v437, %v444
          %v447 = vadd.f32 %v438, %v444
          %448 = vst [vmem:[%s316] sm:$0xff] %v446
          %449 = vst [vmem:[%s316 + $0x8] sm:$0xff] %v447
          %v450 = vld [vmem:[#allocation8] sm:$0xff]
          %v451 = vld [vmem:[#allocation8 + $0x8] sm:$0xff]
          %v452 = vld [vmem:[#allocation8 + $0x10] sm:$0xff]
          %v453 = vld [vmem:[#allocation8 + $0x18] sm:$0xff]
          %v454 = vld [vmem:[#allocation8 + $0x20] sm:$0xff]
          %v455 = vld [vmem:[#allocation8 + $0x28] sm:$0xff]
          %v456 = vld [vmem:[#allocation8 + $0x30] sm:$0xff]
          %v457 = vld [vmem:[#allocation8 + $0x38] sm:$0xff]
          %v458 = vld [vmem:[#allocation8 + $0x40] sm:$0xff]
          %v459 = vld [vmem:[#allocation8 + $0x48] sm:$0xff]
          %v460 = vld [vmem:[#allocation8 + $0x50] sm:$0xff]
          %v461 = vld [vmem:[#allocation8 + $0x58] sm:$0xff]
          %v462 = vld [vmem:[#allocation8 + $0x60] sm:$0xff]
          %v463 = vld [vmem:[#allocation8 + $0x68] sm:$0xff]
          %v464 = vld [vmem:[#allocation8 + $0x70] sm:$0xff]
          %v465 = vld [vmem:[#allocation8 + $0x78] sm:$0xff]
          %v466 = vmul.f32 %v446, %v446
          %v467 = vmul.f32 %v447, %v447
          %468 = vadd.xlane.f32.xlu0 %v466
          %v469 = vpop.xlane.xlu0 %468
          %470 = vadd.xlane.f32.xlu0 %v467
          %v471 = vpop.xlane.xlu0 %470
          %v472 = vmul.f32 %v450, %v450
          %v473 = vmul.f32 %v451, %v451
          %v474 = vmul.f32 %v452, %v452
          %v475 = vmul.f32 %v453, %v453
          %v476 = vmul.f32 %v454, %v454
          %v477 = vmul.f32 %v455, %v455
          %v478 = vmul.f32 %v456, %v456
          %v479 = vmul.f32 %v457, %v457
          %v480 = vmul.f32 %v458, %v458
          %v481 = vmul.f32 %v459, %v459
          %v482 = vmul.f32 %v460, %v460
          %v483 = vmul.f32 %v461, %v461
          %v484 = vmul.f32 %v462, %v462
          %v485 = vmul.f32 %v463, %v463
          %v486 = vmul.f32 %v464, %v464
          %v487 = vmul.f32 %v465, %v465
          %488 = vadd.xlane.f32.xlu0 %v472
          %v489 = vpop.xlane.xlu0 %488
          %490 = vadd.xlane.f32.xlu0 %v473
          %v491 = vpop.xlane.xlu0 %490
          %492 = vadd.xlane.f32.xlu0 %v474
          %v493 = vpop.xlane.xlu0 %492
          %494 = vadd.xlane.f32.xlu0 %v475
          %v495 = vpop.xlane.xlu0 %494
          %496 = vadd.xlane.f32.xlu0 %v476
          %v497 = vpop.xlane.xlu0 %496
          %498 = vadd.xlane.f32.xlu0 %v477
          %v499 = vpop.xlane.xlu0 %498
          %500 = vadd.xlane.f32.xlu0 %v478
          %v501 = vpop.xlane.xlu0 %500
          %502 = vadd.xlane.f32.xlu0 %v479
          %v503 = vpop.xlane.xlu0 %502
          %504 = vadd.xlane.f32.xlu0 %v480
          %v505 = vpop.xlane.xlu0 %504
          %506 = vadd.xlane.f32.xlu0 %v481
          %v507 = vpop.xlane.xlu0 %506
          %508 = vadd.xlane.f32.xlu0 %v482
          %v509 = vpop.xlane.xlu0 %508
          %510 = vadd.xlane.f32.xlu0 %v483
          %v511 = vpop.xlane.xlu0 %510
          %512 = vadd.xlane.f32.xlu0 %v484
          %v513 = vpop.xlane.xlu0 %512
          %514 = vadd.xlane.f32.xlu0 %v485
          %v515 = vpop.xlane.xlu0 %514
          %516 = vadd.xlane.f32.xlu0 %v486
          %v517 = vpop.xlane.xlu0 %516
          %518 = vadd.xlane.f32.xlu0 %v487
          %v519 = vpop.xlane.xlu0 %518
          %520 = vmatprep.subr.mxu0 0.0
          %521 = vmatpush1.xpose.msra.mxu0 %v465
          %522 = vmatprep.subr.mxu0 0.0
          %523 = vmatpush1.xpose.msra.mxu0 %v464
          %524 = vmatprep.subr.mxu0 0.0
          %525 = vmatpush1.xpose.msra.mxu0 %v463
          %526 = vmatprep.subr.mxu0 0.0
          %527 = vmatpush1.xpose.msra.mxu0 %v462
          %528 = vmatprep.subr.mxu0 0.0
          %529 = vmatpush1.xpose.msra.mxu0 %v461
          %530 = vmatprep.subr.mxu0 0.0
          %531 = vmatpush1.xpose.msra.mxu0 %v460
          %532 = vmatprep.subr.mxu0 0.0
          %533 = vmatpush1.xpose.msra.mxu0 %v459
          %534 = vmatprep.subr.mxu0 0.0
          %535 = vmatpush1.xpose.msra.mxu0 %v458
          %536 = vmatprep.subr.mxu0 0.0
          %537 = vmatpush1.xpose.msra.mxu0 %v457
          %538 = vmatprep.subr.mxu0 0.0
          %539 = vmatpush1.xpose.msra.mxu0 %v456
          %540 = vmatprep.subr.mxu0 0.0
          %541 = vmatpush1.xpose.msra.mxu0 %v455
          %542 = vmatprep.subr.mxu0 0.0
          %543 = vmatpush1.xpose.msra.mxu0 %v454
          %544 = vmatprep.subr.mxu0 0.0
          %545 = vmatpush1.xpose.msra.mxu0 %v453
          %546 = vmatprep.subr.mxu0 0.0
          %547 = vmatpush1.xpose.msra.mxu0 %v452
          %548 = vmatprep.subr.mxu0 0.0
          %549 = vmatpush1.xpose.msra.mxu0 %v451
          %550 = vmatprep.subr.mxu0 0.0
          %551 = vmatpush1.xpose.msra.mxu0 %v450
          %552 = vmatprep.subr.mxu0 0.0
          %553 = vmatpush2.xpose.msra.mxu0 0.0
          %554 = vmatprep.subr.mxu0 0.0
          %555 = vmatpush2.xpose.msra.mxu0 0.0
          %556 = vmatprep.subr.mxu0 0.0
          %557 = vmatpush2.xpose.msra.mxu0 0.0
          %558 = vmatprep.subr.mxu0 0.0
          %559 = vmatpush2.xpose.msra.mxu0 0.0
          %560 = vmatprep.subr.mxu0 0.0
          %561 = vmatpush2.xpose.msra.mxu0 0.0
          %562 = vmatprep.subr.mxu0 0.0
          %563 = vmatpush2.xpose.msra.mxu0 0.0
          %564 = vmatprep.subr.mxu0 0.0
          %565 = vmatpush2.xpose.msra.mxu0 0.0
          %566 = vmatprep.subr.mxu0 0.0
          %567 = vmatpush2.xpose.msra.mxu0 0.0
          %568 = vmatprep.subr.mxu0 0.0
          %569 = vmatpush2.xpose.msra.mxu0 0.0
          %570 = vmatprep.subr.mxu0 0.0
          %571 = vmatpush2.xpose.msra.mxu0 0.0
          %572 = vmatprep.subr.mxu0 0.0
          %573 = vmatpush2.xpose.msra.mxu0 0.0
          %574 = vmatprep.subr.mxu0 0.0
          %575 = vmatpush2.xpose.msra.mxu0 0.0
          %576 = vmatprep.subr.mxu0 0.0
          %577 = vmatpush2.xpose.msra.mxu0 0.0
          %578 = vmatprep.subr.mxu0 0.0
          %579 = vmatpush2.xpose.msra.mxu0 0.0
          %580 = vmatprep.subr.mxu0 0.0
          %581 = vmatpush2.xpose.msra.mxu0 0.0
          %582 = vmatprep.subr.mxu0 0.0
          %583 = vmatpush2.xpose.msra.mxu0 0.0
          %584 = vmatprep.mubr.f32.mxu0 0.0
          %585 = vmatmul.mubr.f32.gmra.mxu0 %v446
          %v586 = vpop.f32.mrf.mxu0
          %v587 = vadd.f32 0.0, %v586
          %v588 = vpop.f32.mrf.mxu0
          %589 = vmatprep.mubr.f32.mxu0 0.0
          %590 = vmatmul.mubr.f32.gmra.mxu0 %v447
          %v591 = vpop.f32.mrf.mxu0
          %v592 = vadd.f32 0.0, %v591
          %v593 = vpop.f32.mrf.mxu0
          %594 = vdwg.mxu0
          %v595 = vmul.f32 %v587, 2.0
          %v596 = vmul.f32 %v592, 2.0
          %v597 = vsub.f32 %v469, %v595
          %v598 = vsub.f32 %v471, %v596
          %v615 = vlaneseq
          %v616 = vand.u32 %v615, 127
          %v617 = vlaneseq
          %v618 = vshrl.u32 %v617, 7
          %v619 = vsub.s32 %v616, %v618
          %v620 = vrot.slane %v489, %v619
          %v621 = vadd.s32 %v616, 4294967288
          %v622 = vlaneseq
          %v623 = vshrl.u32 %v622, 7
          %v624 = vsub.s32 %v621, %v623
          %v625 = vrot.slane %v491, %v624
          %vm626 = vcmask 130112
          %v627 = vsel %vm626, %v625, %v620
          %v628 = vadd.s32 %v616, 4294967280
          %v629 = vlaneseq
          %v630 = vshrl.u32 %v629, 7
          %v631 = vsub.s32 %v628, %v630
          %v632 = vrot.slane %v493, %v631
          %vm633 = vcmask 195712
          %v634 = vsel %vm633, %v632, %v627
          %v635 = vadd.s32 %v616, 4294967272
          %v636 = vlaneseq
          %v637 = vshrl.u32 %v636, 7
          %v638 = vsub.s32 %v635, %v637
          %v639 = vrot.slane %v495, %v638
          %vm640 = vcmask 261312
          %v641 = vsel %vm640, %v639, %v634
          %v642 = vadd.s32 %v616, 4294967264
          %v643 = vlaneseq
          %v644 = vshrl.u32 %v643, 7
          %v645 = vsub.s32 %v642, %v644
          %v646 = vrot.slane %v497, %v645
          %vm647 = vcmask 326912
          %v648 = vsel %vm647, %v646, %v641
          %v649 = vadd.s32 %v616, 4294967256
          %v650 = vlaneseq
          %v651 = vshrl.u32 %v650, 7
          %v652 = vsub.s32 %v649, %v651
          %v653 = vrot.slane %v499, %v652
          %vm654 = vcmask 392512
          %v655 = vsel %vm654, %v653, %v648
          %v656 = vadd.s32 %v616, 4294967248
          %v657 = vlaneseq
          %v658 = vshrl.u32 %v657, 7
          %v659 = vsub.s32 %v656, %v658
          %v660 = vrot.slane %v501, %v659
          %vm661 = vcmask 458112
          %v662 = vsel %vm661, %v660, %v655
          %v663 = vadd.s32 %v616, 4294967240
          %v664 = vlaneseq
          %v665 = vshrl.u32 %v664, 7
          %v666 = vsub.s32 %v663, %v665
          %v667 = vrot.slane %v503, %v666
          %vm668 = vcmask 523712
          %v669 = vsel %vm668, %v667, %v662
          %v670 = vadd.s32 %v616, 4294967232
          %v671 = vlaneseq
          %v672 = vshrl.u32 %v671, 7
          %v673 = vsub.s32 %v670, %v672
          %v674 = vrot.slane %v505, %v673
          %vm675 = vcmask 589312
          %v676 = vsel %vm675, %v674, %v669
          %v677 = vadd.s32 %v616, 4294967224
          %v678 = vlaneseq
          %v679 = vshrl.u32 %v678, 7
          %v680 = vsub.s32 %v677, %v679
          %v681 = vrot.slane %v507, %v680
          %vm682 = vcmask 654912
          %v683 = vsel %vm682, %v681, %v676
          %v684 = vadd.s32 %v616, 4294967216
          %v685 = vlaneseq
          %v686 = vshrl.u32 %v685, 7
          %v687 = vsub.s32 %v684, %v686
          %v688 = vrot.slane %v509, %v687
          %vm689 = vcmask 720512
          %v690 = vsel %vm689, %v688, %v683
          %v691 = vadd.s32 %v616, 4294967208
          %v692 = vlaneseq
          %v693 = vshrl.u32 %v692, 7
          %v694 = vsub.s32 %v691, %v693
          %v695 = vrot.slane %v511, %v694
          %vm696 = vcmask 786112
          %v697 = vsel %vm696, %v695, %v690
          %v698 = vadd.s32 %v616, 4294967200
          %v699 = vlaneseq
          %v700 = vshrl.u32 %v699, 7
          %v701 = vsub.s32 %v698, %v700
          %v702 = vrot.slane %v513, %v701
          %vm703 = vcmask 851712
          %v704 = vsel %vm703, %v702, %v697
          %v705 = vadd.s32 %v616, 4294967192
          %v706 = vlaneseq
          %v707 = vshrl.u32 %v706, 7
          %v708 = vsub.s32 %v705, %v707
          %v709 = vrot.slane %v515, %v708
          %vm710 = vcmask 917312
          %v711 = vsel %vm710, %v709, %v704
          %v712 = vadd.s32 %v616, 4294967184
          %v713 = vlaneseq
          %v714 = vshrl.u32 %v713, 7
          %v715 = vsub.s32 %v712, %v714
          %v716 = vrot.slane %v517, %v715
          %vm717 = vcmask 982912
          %v718 = vsel %vm717, %v716, %v711
          %v719 = vadd.s32 %v616, 4294967176
          %v720 = vlaneseq
          %v721 = vshrl.u32 %v720, 7
          %v722 = vsub.s32 %v719, %v721
          %v723 = vrot.slane %v519, %v722
          %vm724 = vcmask 1048512
          %v725 = vsel %vm724, %v723, %v718
          %vm726 = vcmask 1042434
          %v727 = vsel %vm726, %v725, %v725
          %vm728 = vcmask 1043459
          %v729 = vsel %vm728, %v725, %v727
          %vm730 = vcmask 1044484
          %v731 = vsel %vm730, %v725, %v729
          %vm732 = vcmask 1045509
          %v733 = vsel %vm732, %v725, %v731
          %vm734 = vcmask 1046534
          %v735 = vsel %vm734, %v725, %v733
          %vm736 = vcmask 1047559
          %v737 = vsel %vm736, %v725, %v735
          %v739 = vadd.f32 %v597, %v737
          %v740 = vadd.f32 %v598, %v737
          %v741 = vmax.f32 %v739, 0.0
          %v742 = vmax.f32 %v740, 0.0
          %v743 = vadd.f32 %v741, 1.0
          %v744 = vadd.f32 %v742, 1.0
          %v745 = vrcp.pop %v743
          %v746 = vrcp.pop %v744
          %v747 = vmul.f32 %v745, %v745
          %v748 = vmul.f32 %v746, %v746
          %vm749 = vcmp.lt.s32.totalorder %v616, 10
          %v750 = vsel %vm749, %v747, 0.0
          %v751 = vsel %vm749, %v748, 0.0
          %752 = vadd.xlane.f32.xlu0 %v750
          %v753 = vpop.xlane.xlu0 %752
          %754 = vadd.xlane.f32.xlu0 %v751
          %v755 = vpop.xlane.xlu0 %754
          %v756 = vrcp.pop %v753
          %v757 = vrcp.pop %v755
          %v758 = vmul.f32 %v750, %v756
          %v759 = vmul.f32 %v751, %v757
          %760 = vst [vmem:[%s323] sm:$0xff] %v758
          %761 = vst [vmem:[%s323 + $0x8] sm:$0xff] %v759
        $region56: #{tpu_custom_call.1} parent=35 // pred_fallthru
          _
        %s762 = sand.u32 %s145, 1
        %s763 = scalar_lea.sflag [#allocation5], %s762
        %s764 = sand.u32 %s145, 1
        %s765 = smul.addr %s764, 16
        %s766 = scalar_lea.vmem [#allocation9], %s765
        %s767 = sand.u32 %s171, 1
        %s768 = scalar_lea.sflag [#allocation11], %s767
        %s769 = sand.u32 %s171, 1
        %s770 = smul.addr %s769, 16
        %s771 = scalar_lea.vmem [#allocation10], %s770
        // Predicated region
        $region57: #{tpu_custom_call.1} parent=35 // pred_check
          %p772 = pneg %p155
        $region58: #{tpu_custom_call.1} parent=35 // pred_check_branch
          %774 = sbr.rel (%p772) target = $region60
        $region59: #{tpu_custom_call.1} parent=35 // pred_region
          %s775 = smul.u32 2, %s33
          %s777 = ssub.s32 256, 256
          %778 = vsyncadd %s763, %s777
          %s779 = smul.addr %s775, 128
          %s780 = scalar_lea.hbm %s4, %s779
          %s781 = sshll.u32 %s766, 4
          %s782 = int_to_ptr.vmem [resolvable:$true] %s781
          %787 = dma.vmem_to_hbm [thread:$0]  %s782, 256, %s780, %s763, 128, 128, 8
        $region60: #{tpu_custom_call.1} parent=35 // pred_fallthru
          _
        // Predicated region
        $region61: #{tpu_custom_call.1} parent=35 // pred_check
          %p788 = pneg %p181
        $region62: #{tpu_custom_call.1} parent=35 // pred_check_branch
          %790 = sbr.rel (%p788) target = $region64
        $region63: #{tpu_custom_call.1} parent=35 // pred_region
          %s791 = smul.u32 2, %s33
          %s793 = ssub.s32 256, 256
          %794 = vsyncadd %s768, %s793
          %s795 = smul.addr %s791, 128
          %s796 = scalar_lea.hbm %s5, %s795
          %s797 = sshll.u32 %s771, 4
          %s798 = int_to_ptr.vmem [resolvable:$true] %s797
          %803 = dma.vmem_to_hbm [thread:$0]  %s798, 256, %s796, %s768, 128, 128, 8
        $region64: #{tpu_custom_call.1} parent=35 // pred_fallthru
          _
      $region36: #{tpu_custom_call.1} parent=5 // pred_fallthru
        _
      %p804 = scmp.le.s32.totalorder 2, %s24
      // Predicated region
      $region65: #{tpu_custom_call.1} parent=5 // pred_check
        %p805 = pneg %p804
      $region66: #{tpu_custom_call.1} parent=5 // pred_check_branch
        %807 = sbr.rel (%p805) target = $region68
      $region67: #{tpu_custom_call.1} parent=5 // pred_region
        %s808 = ssub.s32 %s24, 2
        // Predicated region
        $region69: #{tpu_custom_call.1} parent=67 // pred_check
          %p809 = pneg %p161
        $region70: #{tpu_custom_call.1} parent=67 // pred_check_branch
          %811 = sbr.rel (%p809) target = $region72
        $region71: #{tpu_custom_call.1} parent=67 // pred_region
          %s812 = sand.u32 %s146, 1
          %s813 = scalar_lea.sflag [#allocation5], %s812
          %s814 = sand.u32 %s146, 1
          %s815 = smul.addr %s814, 16
          %s816 = scalar_lea.vmem [#allocation9], %s815
          %817 = dma.done %s813, 256
        $region72: #{tpu_custom_call.1} parent=67 // pred_fallthru
          _
        // Predicated region
        $region73: #{tpu_custom_call.1} parent=67 // pred_check
          %p818 = pneg %p187
        $region74: #{tpu_custom_call.1} parent=67 // pred_check_branch
          %820 = sbr.rel (%p818) target = $region76
        $region75: #{tpu_custom_call.1} parent=67 // pred_region
          %s821 = sand.u32 %s172, 1
          %s822 = scalar_lea.sflag [#allocation11], %s821
          %s823 = sand.u32 %s172, 1
          %s824 = smul.addr %s823, 16
          %s825 = scalar_lea.vmem [#allocation10], %s824
          %826 = dma.done %s822, 256
        $region76: #{tpu_custom_call.1} parent=67 // pred_fallthru
          _
      $region68: #{tpu_custom_call.1} parent=5 // pred_fallthru
        _
    $region6: #{tpu_custom_call.1} parent=1 // loop_footer
      %s28 = sadd.s32 1, %s24
    $region7: #{tpu_custom_call.1} parent=1 // loop_footer_branch
      %23 = sbr.rel target = $region3
    $region8: #{tpu_custom_call.1} parent=1 // loop_exit
      _
    %827 = vsyncpa [#allocation4], 1
    %s828 = scalar_lea.sflag [#allocation4], 1
    %829 = vsyncpa %s828, 1
    %830 = vsyncpa [#allocation7], 1
    %s831 = scalar_lea.sflag [#allocation7], 1
    %832 = vsyncpa %s831, 1
    %833 = vsyncpa [#allocation5], 1
    %s834 = scalar_lea.sflag [#allocation5], 1
    %835 = vsyncpa %s834, 1
    %836 = vsyncpa [#allocation11], 1
    %s837 = scalar_lea.sflag [#allocation11], 1
    %838 = vsyncpa %s837, 1

</llo_original>
